<compile_context>
chip_gen: v6e
topology: v6e:2x2x1
jax: 0.10.0
libtpu: 0.0.40
codegen_flags: <defaults>
</compile_context>

<pallas_src>
import jax
import jax.numpy as jnp
from jax.experimental import pallas as pl
from jax.experimental.pallas import tpu as pltpu


# ----------------------------------------------------------------------------
# Pallas kernel: o = neg_lam * g   (neg_lam = -lambda, f32 scalar in SMEM)
# ----------------------------------------------------------------------------
def _neg_scale_kernel(neg_lam_ref, g_ref, o_ref):
    scale = neg_lam_ref[0].astype(o_ref.dtype)   # cast once; native-dtype VPU mul
    o_ref[...] = g_ref[...] * scale


# ----------------------------------------------------------------------------
# Tiling helpers
# ----------------------------------------------------------------------------
_LANE_CANDIDATES = (8192, 4096, 2048, 1024, 512, 256, 128)
_TARGET_TILE_BYTES = 4 * 1024 * 1024          # ~4 MiB tiles (v6e/v7x sweet spot)
_VMEM_LIMIT_BYTES = 32 * 1024 * 1024          # raise v5e's 16 MiB default scope


def _largest_div_tile(rows, hi, lo):
    """Largest multiple of 8 in [lo, hi] that divides rows, or None."""
    t = (min(hi, rows) // 8) * 8
    while t >= lo:
        if rows % t == 0:
            return t
        t -= 8
    return None


def _choose_tile_rows(rows, lanes, itemsize):
    cap = max(8, (_TARGET_TILE_BYTES // (lanes * itemsize)) // 8 * 8)
    if rows <= 8:
        return rows                      # single full-extent block (layout-legal)
    if rows <= cap:
        # Split into ~4 blocks so the pipeline and both TCs (v7x) have work.
        desired = max(8, (((rows + 3) // 4) + 7) // 8 * 8)
        t = _largest_div_tile(rows, desired, 8)
        return t if t is not None else desired
    # rows > cap: prefer a divisor near cap -> no ragged (masked) last block.
    t = _largest_div_tile(rows, cap, max(8, cap // 2))
    return t if t is not None else cap


def _neg_scale_2d(g2d, neg_lam32):
    rows, lanes = g2d.shape
    tile_r = _choose_tile_rows(rows, lanes, g2d.dtype.itemsize)
    grid = (pl.cdiv(rows, tile_r),)
    return pl.pallas_call(
        _neg_scale_kernel,
        out_shape=jax.ShapeDtypeStruct(g2d.shape, g2d.dtype),
        grid=grid,
        in_specs=[
            pl.BlockSpec(memory_space=pltpu.MemorySpace.SMEM),   # -lambda scalar
            pl.BlockSpec((tile_r, lanes), lambda i: (i, 0)),     # grad block
        ],
        out_specs=pl.BlockSpec((tile_r, lanes), lambda i: (i, 0)),
        input_output_aliases={1: 0},      # write the scaled gradient in place
        compiler_params=pltpu.CompilerParams(
            dimension_semantics=("parallel",),   # shard grid across TCs (v7x)
            vmem_limit_bytes=_VMEM_LIMIT_BYTES,
        ),
    )(neg_lam32, g2d)


def _neg_scale(g, lam):
    """Compute -lam * g; Pallas kernel on the lane-aligned common case."""
    shape, n = g.shape, g.size
    if n == 0:
        return g
    neg_lam32 = (-jnp.asarray(lam, dtype=jnp.float32)).reshape(1)
    if n % 128 != 0:
        # Rare fallback: not lane-aligned. A plain scale that XLA fuses beats a
        # pad + kernel + slice (which would triple HBM traffic on this path).
        return (neg_lam32[0].astype(g.dtype) * g)
    flat = g.reshape(-1)                                  # metadata-only reshape
    lanes = next(l for l in _LANE_CANDIDATES if n % l == 0)
    out = _neg_scale_2d(flat.reshape(n // lanes, lanes), neg_lam32)
    return out.reshape(shape)


# ----------------------------------------------------------------------------
# GRL with custom VJP: forward = identity, backward = -lambda * grad.
# ----------------------------------------------------------------------------
@jax.custom_vjp
def grl(x, lambda_):
    # Forward: identity (PyTorch view_as) — zero-copy, no kernel needed.
    return x


def _grl_fwd(x, lambda_):
    return x, jnp.asarray(lambda_, dtype=jnp.float32)


def _grl_bwd(lam, g):
    dx = _neg_scale(g, lam)
    # PyTorch returns None for lambda's grad; here we return a zero cotangent.
    return dx, jnp.zeros_like(lam)


grl.defvjp(_grl_fwd, _grl_bwd)


class GRL:
    """JAX/Pallas equivalent of the PyTorch GRL module."""

    def __init__(self, lambda_=0.0):
        self.lambda_ = jnp.asarray(lambda_, dtype=jnp.float32)

    def set_lambda(self, lambda_):
        self.lambda_ = jnp.asarray(lambda_, dtype=jnp.float32)

    def __call__(self, x):
        return grl(x, self.lambda_)


# ----------------------------------------------------------------------------
# Demo / smoke test
# ----------------------------------------------------------------------------
if __name__ == "__main__":
    key = jax.random.PRNGKey(0)
    # layout: NCHW, matching the PyTorch convention.
    x = jax.random.normal(key, (2, 4, 16, 16), dtype=jnp.float32)

    mod = GRL(lambda_=0.0)
    mod.set_lambda(0.5)

    # Forward: identity.
    y = jax.block_until_ready(mod(x))
    assert y.shape == x.shape and y.dtype == x.dtype
    assert jnp.allclose(y, x), "GRL forward must be identity"

    # Backward: gradient of sum(grl(x)) w.r.t. x should be -lambda everywhere.
    def loss(inp):
        return jnp.sum(grl(inp, mod.lambda_))

    dx = jax.block_until_ready(jax.grad(loss)(x))
    assert dx.shape == x.shape and dx.dtype == x.dtype
    assert jnp.allclose(dx, -0.5 * jnp.ones_like(x)), "GRL backward mismatch"

    # Exercise the multi-block Pallas path directly (rows > 8 -> pipelined grid).
    g_big = jax.random.normal(jax.random.PRNGKey(1), (128, 1024), dtype=jnp.float32)
    ref = -0.5 * g_big
    out = jax.block_until_ready(_neg_scale(g_big, mod.lambda_))
    assert jnp.allclose(out, ref, rtol=1e-6, atol=1e-6), "neg-scale kernel mismatch"

    print("KERNEL_OK")
</pallas_src>

<mosaic_0001>
module attributes {stable_mosaic.version = 11 : i64} {
  func.func @_neg_scale_kernel(%arg0: i32, %arg1: memref<1xf32, #tpu.memory_space<smem>>, %arg2: memref<1x2048xf32, #tpu.memory_space<vmem>>, %arg3: memref<1x2048xf32, #tpu.memory_space<vmem>>) attributes {dimension_semantics = [#tpu.dimension_semantics<parallel>], iteration_bounds = array<i64: 1>, scalar_prefetch = 0 : i64, scratch_operands = 0 : i64, tpu.core_type = #tpu.core_type<tc>, window_params = [{transform_indices = @transform_0, window_bounds = array<i64: 1>}, {transform_indices = @transform_1, window_bounds = array<i64: 1, 2048>}, {transform_indices = @transform_2, window_bounds = array<i64: 1, 2048>}]} {
    %c0 = arith.constant 0 : index
    %0 = memref.load %arg1[%c0] : memref<1xf32, #tpu.memory_space<smem>>
    %c0_0 = arith.constant 0 : index
    %c0_1 = arith.constant 0 : index
    %1 = vector.load %arg2[%c0_0, %c0_1] : memref<1x2048xf32, #tpu.memory_space<vmem>>, vector<1x2048xf32>
    %2 = vector.broadcast %0 : f32 to vector<1x2048xf32>
    %3 = arith.mulf %1, %2 : vector<1x2048xf32>
    %c0_2 = arith.constant 0 : index
    %c0_3 = arith.constant 0 : index
    %4 = vector.load %arg3[%c0_2, %c0_3] : memref<1x2048xf32, #tpu.memory_space<vmem>>, vector<1x2048xf32>
    tpu.vector_store %arg3[%c0_2, %c0_3], %3 {strides = array<i32>} : memref<1x2048xf32, #tpu.memory_space<vmem>>, vector<1x2048xf32>,
    return
  }
  func.func @transform_0(%arg0: i32) -> i32 {
    %c0_i32 = arith.constant 0 : i32
    %c0_i32_0 = arith.constant 0 : i32
    return %c0_i32 : i32
  }
  func.func @transform_1(%arg0: i32) -> (i32, i32) {
    %c0_i32 = arith.constant 0 : i32
    %c0_i32_0 = arith.constant 0 : i32
    return %arg0, %c0_i32 : i32, i32
  }
  func.func @transform_2(%arg0: i32) -> (i32, i32) {
    %c0_i32 = arith.constant 0 : i32
    %c0_i32_0 = arith.constant 0 : i32
    return %arg0, %c0_i32 : i32, i32
  }
}

</mosaic_0001>

<llo_original>
// kernel: tpu_custom_call.1
$region0: #{tpu_custom_call.1}
  #allocation0 [shape = 'u32[]', space=smem, size = 0x4, offset = 0x4, fixed_abs, tag = 'smem constant byte address 0x4 - core index']
  #allocation1 [shape = 'u32[144,128]{1,0:T(1,128)}', space=vmem, size = 0x12000, scoped, tag = 'internal scratch']
  #allocation2 [shape = 'f32[1]{0:T(128)S(6)}', space=smem, size = 0x200, scoped, tag = 'scoped memory for tpu_custom_call.1']
  %s0 = inlined_call_operand.<no memory space> [shape: f32[1], index: 0, kind: input, shape index: {}]
  %s1 = inlined_call_operand.hbm [shape: f32[1,2048], index: 1, kind: input, shape index: {}, may-alias: {1,2}]
  %s2 = inlined_call_operand.hbm [shape: f32[1,2048], index: 2, kind: output, shape index: {}, may-alias: {1,2}]
  %s3 = sld [smem:[#allocation0]]
  $region22: #{tpu_custom_call.1} parent=0
    _
  %s5 = ssub.s32 1, %s3
  %s6 = scalar_select 0, %s5, %s3
  %7 = sst [smem:[#allocation2]] %s0
  $region1: #{tpu_custom_call.1} parent=0
    #allocation3 [shape = 'u8[8192]{0}', space=vmem, size = 0x2000, scoped, tag = 'input window, operand 1, single buffered']
    #allocation4 [shape = 's32[1]{0}', space=sflag, size = 0x4, scoped, tag = 'scoped memory for tpu_custom_call.1']
    #allocation5 [shape = 's32[1]{0}', space=sflag, size = 0x4, scoped, tag = 'scoped memory for tpu_custom_call.1']
    #allocation6 [shape = 'u8[8192]{0}', space=vmem, size = 0x2000, scoped, tag = 'output window, operand 0, single buffered']
    %8 = vsyncpa [#allocation4], 0
    %9 = vsyncpa [#allocation5], 0
    // Predicated region
    $region2: #{tpu_custom_call.1} parent=1 // pred_check
      _
    $region3: #{tpu_custom_call.1} parent=1 // pred_check_branch
      %11 = sbr.rel (0) target = $region5
    $region4: #{tpu_custom_call.1} parent=1 // pred_region
      _
    $region5: #{tpu_custom_call.1} parent=1 // pred_fallthru
      _
    // Predicated region
    $region6: #{tpu_custom_call.1} parent=1 // pred_check
      _
    $region7: #{tpu_custom_call.1} parent=1 // pred_check_branch
      %13 = sbr.rel (0) target = $region9
    $region8: #{tpu_custom_call.1} parent=1 // pred_region
      %s15 = ssub.s32 256, 256
      %16 = vsyncadd [#allocation4], %s15
      %s18 = sshll.u32 [#allocation3], 4
      %s19 = int_to_ptr.vmem [resolvable:$true] %s18
      %21 = dma.hbm_to_vmem [thread:$0]  %s1, 256, %s19, [#allocation4]
    $region9: #{tpu_custom_call.1} parent=1 // pred_fallthru
      _
    // Predicated region
    $region10: #{tpu_custom_call.1} parent=1 // pred_check
      _
    $region11: #{tpu_custom_call.1} parent=1 // pred_check_branch
      %23 = sbr.rel (0) target = $region13
    $region12: #{tpu_custom_call.1} parent=1 // pred_region
      %24 = dma.done [#allocation4], 256
    $region13: #{tpu_custom_call.1} parent=1 // pred_fallthru
      _
    %s25 = sld [smem:[#allocation2]]
    %v26 = vld [vmem:[#allocation3] sm:$0xff]
    %v27 = vld [vmem:[#allocation3 + $0x8] sm:$0xff]
    %v28 = vstv %s25
    %v29 = vmul.f32 %v26, %v28
    %v30 = vmul.f32 %v27, %v28
    %31 = vst [vmem:[#allocation6] sm:$0xff] %v29
    %32 = vst [vmem:[#allocation6 + $0x8] sm:$0xff] %v30
    // Predicated region
    $region14: #{tpu_custom_call.1} parent=1 // pred_check
      _
    $region15: #{tpu_custom_call.1} parent=1 // pred_check_branch
      %34 = sbr.rel (0) target = $region17
    $region16: #{tpu_custom_call.1} parent=1 // pred_region
      %s36 = ssub.s32 256, 256
      %37 = vsyncadd [#allocation5], %s36
      %s39 = sshll.u32 [#allocation6], 4
      %s40 = int_to_ptr.vmem [resolvable:$true] %s39
      %42 = dma.vmem_to_hbm [thread:$0]  %s40, 256, %s2, [#allocation5]
    $region17: #{tpu_custom_call.1} parent=1 // pred_fallthru
      _
    // Predicated region
    $region18: #{tpu_custom_call.1} parent=1 // pred_check
      _
    $region19: #{tpu_custom_call.1} parent=1 // pred_check_branch
      %44 = sbr.rel (0) target = $region21
    $region20: #{tpu_custom_call.1} parent=1 // pred_region
      %45 = dma.done [#allocation5], 256
    $region21: #{tpu_custom_call.1} parent=1 // pred_fallthru
      _
    %46 = vsyncpa [#allocation4], 1
    %47 = vsyncpa [#allocation5], 1

</llo_original>
